<compile_context>
chip_gen: v5e
topology: v5e:2x2
jax: 0.10.0
libtpu: 0.0.40
codegen_flags: <defaults>
</compile_context>

<pallas_src>
import jax
import jax.numpy as jnp
from jax.experimental import pallas as pl
from jax.experimental.pallas import tpu as pltpu


def _round_up(x, m):
    return ((x + m - 1) // m) * m


def gated_attn_kernel(x_ref, wab_ref, bab_ref, wc_ref, bc_ref, out_ref):
    # x tile: (TN, L) bf16; fused (L, 2*Dp) gate matmul on the bf16 MXU path,
    # accumulated in f32.
    x = x_ref[...]
    ab = (jnp.dot(x, wab_ref[...], preferred_element_type=jnp.float32)
          + bab_ref[...])                       # (TN, 2*Dp), f32

    Dp = wc_ref.shape[0]                        # multiple of 128 -> free views
    a = jnp.tanh(ab[:, :Dp])                    # gate a (EUP, f32)
    b = jax.nn.sigmoid(ab[:, Dp:])              # gate b (EUP, f32)

    gated = (a * b).astype(wc_ref.dtype)        # bf16 into the second MXU pass
    out = (jnp.dot(gated, wc_ref[...], preferred_element_type=jnp.float32)
           + bc_ref[...])                       # (TN, NCP), f32, lane-dense
    out_ref[...] = out.astype(out_ref.dtype)


def prepare_params(wa, ba, wb, bb, wc, bc, *, compute_dtype=jnp.bfloat16):
    """One-time weight prep.

    Inputs are PyTorch-convention: wa/wb (D, L), wc (n_classes, D),
    biases (D,) / (n_classes,).  Returns fused / transposed / lane-padded
    parameters; matmul weights are cast to `compute_dtype` (bf16), biases f32.
    """
    D, L = wa.shape
    n_classes = wc.shape[0]
    Dp = max(128, _round_up(D, 128))            # lane-aligned gate width
    NCP = max(128, _round_up(n_classes, 128))   # lane-dense output width

    f32 = jnp.float32
    wa_t = jnp.zeros((L, Dp), f32).at[:, :D].set(wa.T.astype(f32))
    wb_t = jnp.zeros((L, Dp), f32).at[:, :D].set(wb.T.astype(f32))
    wab = jnp.concatenate([wa_t, wb_t], axis=1).astype(compute_dtype)  # (L, 2Dp)

    ba_p = jnp.zeros((Dp,), f32).at[:D].set(ba.astype(f32))
    bb_p = jnp.zeros((Dp,), f32).at[:D].set(bb.astype(f32))
    bab = jnp.concatenate([ba_p, bb_p]).reshape(1, 2 * Dp)             # f32

    wc_p = (jnp.zeros((Dp, NCP), f32)
            .at[:D, :n_classes].set(wc.T.astype(f32))
            .astype(compute_dtype))                                    # (Dp, NCP)
    bc_p = jnp.zeros((1, NCP), f32).at[:, :n_classes].set(
        bc.reshape(1, n_classes).astype(f32))                          # f32
    return wab, bab, wc_p, bc_p, n_classes


def attn_net_gated_forward(x, wab, bab, wc_p, bc_p, n_classes, *, tile_n=None):
    """x: (N, L). Returns (A, x) with A: (N, n_classes) in x.dtype."""
    N, L = x.shape
    D2 = wab.shape[1]
    Dp, NCP = wc_p.shape

    # --- chip-aware tiling / VMEM budget ------------------------------------
    try:
        vmem_cap = int(pltpu.get_tpu_info().vmem_capacity_bytes)
    except Exception:
        vmem_cap = 64 << 20                      # conservative (v7x) fallback
    small_vmem = vmem_cap <= (64 << 20)          # v7x: 64 MiB/TC; v5e/v6e: 128 MiB
    if tile_n is None:
        tile_n = 1024 if small_vmem else 2048
    vmem_clamp = (40 << 20) if small_vmem else (96 << 20)

    TN = min(tile_n, _round_up(N, 8))
    steps = pl.cdiv(N, TN)
    if small_vmem and steps > 1 and steps % 2 == 1:
        # v7x has 2 TensorCores sharding the parallel axis: prefer an even
        # step count so neither core sits idle on the tail.
        TN = _round_up(pl.cdiv(N, steps + 1), 8)
        steps = pl.cdiv(N, TN)
    grid = (steps,)

    # bf16 feed for the MXU (in production x should already arrive as bf16).
    x_in = x.astype(wab.dtype)
    x_isz = jnp.dtype(x_in.dtype).itemsize
    w_isz = jnp.dtype(wab.dtype).itemsize
    o_isz = jnp.dtype(x.dtype).itemsize

    # VMEM budget: double-buffered x/out tiles + single-buffered resident
    # weights/biases + f32 intermediates, with 2x headroom, chip-aware clamp.
    est = (2 * TN * L * x_isz
           + 2 * TN * NCP * o_isz
           + (L * D2 + Dp * NCP) * w_isz
           + (D2 + NCP) * 4
           + TN * (D2 + Dp + NCP) * 4)
    vmem_limit = int(min(max(2 * est, 32 << 20), vmem_clamp))

    cost = pl.CostEstimate(
        flops=2 * N * L * D2 + 2 * N * Dp * NCP,
        transcendentals=2 * N * Dp,
        bytes_accessed=(N * L * x_isz
                        + (L * D2 + Dp * NCP) * w_isz + (D2 + NCP) * 4
                        + N * NCP * o_isz),
    )

    def make_call(single_buffer_weights):
        wkw = {"pipeline_mode": pl.Buffered(1)} if single_buffer_weights else {}
        in_specs = [
            pl.BlockSpec((TN, L), lambda i: (i, 0)),           # x row tile
            pl.BlockSpec((L, D2), lambda i: (0, 0), **wkw),    # fused gate W (bf16)
            pl.BlockSpec((1, D2), lambda i: (0, 0), **wkw),    # fused gate bias (f32)
            pl.BlockSpec((Dp, NCP), lambda i: (0, 0), **wkw),  # padded Wc (bf16)
            pl.BlockSpec((1, NCP), lambda i: (0, 0), **wkw),   # padded bc (f32)
        ]
        return pl.pallas_call(
            gated_attn_kernel,
            out_shape=jax.ShapeDtypeStruct((N, NCP), x.dtype),
            grid=grid,
            in_specs=in_specs,
            out_specs=pl.BlockSpec((TN, NCP), lambda i: (i, 0)),
            compiler_params=pltpu.CompilerParams(
                dimension_semantics=("parallel",),
                vmem_limit_bytes=vmem_limit),
            cost_estimate=cost,
        )

    try:
        A_pad = make_call(True)(x_in, wab, bab, wc_p, bc_p)
    except Exception:
        # Some Pallas versions reject Buffered(1) on resident operands; the
        # default double-buffered path only costs ~1 MiB extra VMEM in bf16.
        A_pad = make_call(False)(x_in, wab, bab, wc_p, bc_p)

    A = A_pad[:, :n_classes]
    # Module returns (A, x); x passes through untouched (original dtype).
    return A, x


def init_params(key, L, D, n_classes, dtype=jnp.float32):
    """PyTorch-style Linear init: U(-1/sqrt(fan_in), 1/sqrt(fan_in))."""
    ks = jax.random.split(key, 6)

    def linear(kw, kb, fan_in, fan_out):
        bound = 1.0 / (fan_in ** 0.5)
        w = jax.random.uniform(kw, (fan_out, fan_in), dtype, -bound, bound)
        b = jax.random.uniform(kb, (fan_out,), dtype, -bound, bound)
        return w, b

    wa, ba = linear(ks[0], ks[1], L, D)
    wb, bb = linear(ks[2], ks[3], L, D)
    wc, bc = linear(ks[4], ks[5], D, n_classes)
    return wa, ba, wb, bb, wc, bc


if __name__ == "__main__":
    # Small shapes consistent with the module's forward: x is (N, L).
    # (Real CLAM-style use is N~10k, L=1024, D=256 — same code path, just
    #  more row tiles in the grid.)
    N, L, D, n_classes = 32, 64, 32, 1

    key = jax.random.PRNGKey(0)
    kx, kp = jax.random.split(key)
    x = jax.random.normal(kx, (N, L), dtype=jnp.float32)
    wa, ba, wb, bb, wc, bc = init_params(kp, L, D, n_classes)

    # One-time parameter prep (transpose / fuse gates / pad lanes / bf16 cast).
    wab, bab, wc_p, bc_p, nc = prepare_params(wa, ba, wb, bb, wc, bc)

    A, x_out = attn_net_gated_forward(x, wab, bab, wc_p, bc_p, nc)
    A = jax.block_until_ready(A)
    x_out = jax.block_until_ready(x_out)

    # Reference check in plain JAX (f32).  Matmul inputs are bf16 in the
    # kernel, so the tolerance is loosened accordingly.
    a_ref = jnp.tanh(x @ wa.T + ba)
    b_ref = jax.nn.sigmoid(x @ wb.T + bb)
    A_ref = (a_ref * b_ref) @ wc.T + bc
    assert A.shape == (N, n_classes)
    assert jnp.allclose(A, A_ref, atol=3e-2, rtol=3e-2), "mismatch vs reference"
    assert jnp.array_equal(x_out, x)

    # TODO(synk): dropout=True branch (nn.Dropout(0.25)) is not implemented;
    # this kernel reproduces the PyTorch default dropout=False forward.
    print("KERNEL_OK")
</pallas_src>

<mosaic_0001>
module attributes {stable_mosaic.version = 11 : i64} {
  func.func @gated_attn_kernel(%arg0: i32, %arg1: memref<32x64xbf16, #tpu.memory_space<vmem>>, %arg2: memref<64x256xbf16, #tpu.memory_space<vmem>>, %arg3: memref<1x256xf32, #tpu.memory_space<vmem>>, %arg4: memref<128x128xbf16, #tpu.memory_space<vmem>>, %arg5: memref<1x128xf32, #tpu.memory_space<vmem>>, %arg6: memref<32x128xf32, #tpu.memory_space<vmem>>) attributes {dimension_semantics = [#tpu.dimension_semantics<parallel>], iteration_bounds = array<i64: 1>, scalar_prefetch = 0 : i64, scratch_operands = 0 : i64, tpu.core_type = #tpu.core_type<tc>, window_params = [{transform_indices = @transform_0, window_bounds = array<i64: 32, 64>}, {pipeline_mode = #tpu.pipeline_mode<synchronous>, transform_indices = @transform_1, window_bounds = array<i64: 64, 256>}, {pipeline_mode = #tpu.pipeline_mode<synchronous>, transform_indices = @transform_2, window_bounds = array<i64: 1, 256>}, {pipeline_mode = #tpu.pipeline_mode<synchronous>, transform_indices = @transform_3, window_bounds = array<i64: 128, 128>}, {pipeline_mode = #tpu.pipeline_mode<synchronous>, transform_indices = @transform_4, window_bounds = array<i64: 1, 128>}, {transform_indices = @transform_5, window_bounds = array<i64: 32, 128>}]} {
    %c0 = arith.constant 0 : index
    %c0_0 = arith.constant 0 : index
    %0 = vector.load %arg1[%c0, %c0_0] : memref<32x64xbf16, #tpu.memory_space<vmem>>, vector<32x64xbf16>
    %c0_1 = arith.constant 0 : index
    %c0_2 = arith.constant 0 : index
    %1 = vector.load %arg2[%c0_1, %c0_2] : memref<64x256xbf16, #tpu.memory_space<vmem>>, vector<64x256xbf16>
    %cst = arith.constant dense<0.000000e+00> : vector<32x256xf32>
    %2 = tpu.matmul %0, %1, %cst {dimension_numbers = #tpu.dot_dimension_numbers<[1], [0], [0], [1], [0, 0, 1, 1], [], []>} : vector<32x64xbf16>, vector<64x256xbf16>, vector<32x256xf32> -> vector<32x256xf32>
    %c0_3 = arith.constant 0 : index
    %c0_4 = arith.constant 0 : index
    %3 = vector.load %arg3[%c0_3, %c0_4] : memref<1x256xf32, #tpu.memory_space<vmem>>, vector<1x256xf32>
    %4 = vector.broadcast %3 : vector<1x256xf32> to vector<32x256xf32>
    %5 = arith.addf %2, %4 : vector<32x256xf32>
    %6 = vector.extract_strided_slice %5 {offsets = [0, 0], sizes = [32, 128], strides = [1, 1]} : vector<32x256xf32> to vector<32x128xf32>
    %7 = math.tanh %6 : vector<32x128xf32>
    %8 = vector.extract_strided_slice %5 {offsets = [0, 128], sizes = [32, 128], strides = [1, 1]} : vector<32x256xf32> to vector<32x128xf32>
    %9 = arith.negf %8 : vector<32x128xf32>
    %10 = math.exp %9 : vector<32x128xf32>
    %cst_5 = arith.constant 1.000000e+00 : f32
    %11 = vector.broadcast %cst_5 : f32 to vector<32x128xf32>
    %12 = arith.addf %11, %10 : vector<32x128xf32>
    %13 = arith.divf %11, %12 : vector<32x128xf32>
    %14 = arith.mulf %7, %13 : vector<32x128xf32>
    %15 = arith.truncf %14 : vector<32x128xf32> to vector<32x128xbf16>
    %c0_6 = arith.constant 0 : index
    %c0_7 = arith.constant 0 : index
    %16 = vector.load %arg4[%c0_6, %c0_7] : memref<128x128xbf16, #tpu.memory_space<vmem>>, vector<128x128xbf16>
    %cst_8 = arith.constant dense<0.000000e+00> : vector<32x128xf32>
    %17 = tpu.matmul %15, %16, %cst_8 {dimension_numbers = #tpu.dot_dimension_numbers<[1], [0], [0], [1], [0, 0, 1, 1], [], []>} : vector<32x128xbf16>, vector<128x128xbf16>, vector<32x128xf32> -> vector<32x128xf32>
    %c0_9 = arith.constant 0 : index
    %c0_10 = arith.constant 0 : index
    %18 = vector.load %arg5[%c0_9, %c0_10] : memref<1x128xf32, #tpu.memory_space<vmem>>, vector<1x128xf32>
    %19 = vector.broadcast %18 : vector<1x128xf32> to vector<32x128xf32>
    %20 = arith.addf %17, %19 : vector<32x128xf32>
    %c0_11 = arith.constant 0 : index
    %c0_12 = arith.constant 0 : index
    %21 = vector.load %arg6[%c0_11, %c0_12] : memref<32x128xf32, #tpu.memory_space<vmem>>, vector<32x128xf32>
    tpu.vector_store %arg6[%c0_11, %c0_12], %20 {strides = array<i32>} : memref<32x128xf32, #tpu.memory_space<vmem>>, vector<32x128xf32>,
    return
  }
  func.func @transform_0(%arg0: i32) -> (i32, i32) {
    %c0_i32 = arith.constant 0 : i32
    %c0_i32_0 = arith.constant 0 : i32
    return %arg0, %c0_i32 : i32, i32
  }
  func.func @transform_1(%arg0: i32) -> (i32, i32) {
    %c0_i32 = arith.constant 0 : i32
    %c0_i32_0 = arith.constant 0 : i32
    %c0_i32_1 = arith.constant 0 : i32
    return %c0_i32, %c0_i32_0 : i32, i32
  }
  func.func @transform_2(%arg0: i32) -> (i32, i32) {
    %c0_i32 = arith.constant 0 : i32
    %c0_i32_0 = arith.constant 0 : i32
    %c0_i32_1 = arith.constant 0 : i32
    return %c0_i32, %c0_i32_0 : i32, i32
  }
  func.func @transform_3(%arg0: i32) -> (i32, i32) {
    %c0_i32 = arith.constant 0 : i32
    %c0_i32_0 = arith.constant 0 : i32
    %c0_i32_1 = arith.constant 0 : i32
    return %c0_i32, %c0_i32_0 : i32, i32
  }
  func.func @transform_4(%arg0: i32) -> (i32, i32) {
    %c0_i32 = arith.constant 0 : i32
    %c0_i32_0 = arith.constant 0 : i32
    %c0_i32_1 = arith.constant 0 : i32
    return %c0_i32, %c0_i32_0 : i32, i32
  }
  func.func @transform_5(%arg0: i32) -> (i32, i32) {
    %c0_i32 = arith.constant 0 : i32
    %c0_i32_0 = arith.constant 0 : i32
    return %arg0, %c0_i32 : i32, i32
  }
}

module attributes {stable_mosaic.version = 11 : i64} {
  func.func @gated_attn_kernel(%arg0: i32, %arg1: memref<32x64xbf16, #tpu.memory_space<vmem>>, %arg2: memref<64x256xbf16, #tpu.memory_space<vmem>>, %arg3: memref<1x256xf32, #tpu.memory_space<vmem>>, %arg4: memref<128x128xbf16, #tpu.memory_space<vmem>>, %arg5: memref<1x128xf32, #tpu.memory_space<vmem>>, %arg6: memref<32x128xf32, #tpu.memory_space<vmem>>) attributes {dimension_semantics = [#tpu.dimension_semantics<parallel>], iteration_bounds = array<i64: 1>, scalar_prefetch = 0 : i64, scratch_operands = 0 : i64, tpu.core_type = #tpu.core_type<tc>, window_params = [{transform_indices = @transform_0, window_bounds = array<i64: 32, 64>}, {pipeline_mode = #tpu.pipeline_mode<synchronous>, transform_indices = @transform_1, window_bounds = array<i64: 64, 256>}, {pipeline_mode = #tpu.pipeline_mode<synchronous>, transform_indices = @transform_2, window_bounds = array<i64: 1, 256>}, {pipeline_mode = #tpu.pipeline_mode<synchronous>, transform_indices = @transform_3, window_bounds = array<i64: 128, 128>}, {pipeline_mode = #tpu.pipeline_mode<synchronous>, transform_indices = @transform_4, window_bounds = array<i64: 1, 128>}, {transform_indices = @transform_5, window_bounds = array<i64: 32, 128>}]} {
    %c0 = arith.constant 0 : index
    %c0_0 = arith.constant 0 : index
    %0 = vector.load %arg1[%c0, %c0_0] : memref<32x64xbf16, #tpu.memory_space<vmem>>, vector<32x64xbf16>
    %c0_1 = arith.constant 0 : index
    %c0_2 = arith.constant 0 : index
    %1 = vector.load %arg2[%c0_1, %c0_2] : memref<64x256xbf16, #tpu.memory_space<vmem>>, vector<64x256xbf16>
    %cst = arith.constant dense<0.000000e+00> : vector<32x256xf32>
    %2 = tpu.matmul %0, %1, %cst {dimension_numbers = #tpu.dot_dimension_numbers<[1], [0], [0], [1], [0, 0, 1, 1], [], []>} : vector<32x64xbf16>, vector<64x256xbf16>, vector<32x256xf32> -> vector<32x256xf32>
    %c0_3 = arith.constant 0 : index
    %c0_4 = arith.constant 0 : index
    %3 = vector.load %arg3[%c0_3, %c0_4] : memref<1x256xf32, #tpu.memory_space<vmem>>, vector<1x256xf32>
    %4 = vector.broadcast %3 : vector<1x256xf32> to vector<32x256xf32>
    %5 = arith.addf %2, %4 : vector<32x256xf32>
    %6 = vector.extract_strided_slice %5 {offsets = [0, 0], sizes = [32, 128], strides = [1, 1]} : vector<32x256xf32> to vector<32x128xf32>
    %7 = math.tanh %6 : vector<32x128xf32>
    %8 = vector.extract_strided_slice %5 {offsets = [0, 128], sizes = [32, 128], strides = [1, 1]} : vector<32x256xf32> to vector<32x128xf32>
    %9 = arith.negf %8 : vector<32x128xf32>
    %10 = math.exp %9 : vector<32x128xf32>
    %cst_5 = arith.constant 1.000000e+00 : f32
    %11 = vector.broadcast %cst_5 : f32 to vector<32x128xf32>
    %12 = arith.addf %11, %10 : vector<32x128xf32>
    %13 = arith.divf %11, %12 : vector<32x128xf32>
    %14 = arith.mulf %7, %13 : vector<32x128xf32>
    %15 = arith.truncf %14 : vector<32x128xf32> to vector<32x128xbf16>
    %c0_6 = arith.constant 0 : index
    %c0_7 = arith.constant 0 : index
    %16 = vector.load %arg4[%c0_6, %c0_7] : memref<128x128xbf16, #tpu.memory_space<vmem>>, vector<128x128xbf16>
    %cst_8 = arith.constant dense<0.000000e+00> : vector<32x128xf32>
    %17 = tpu.matmul %15, %16, %cst_8 {dimension_numbers = #tpu.dot_dimension_numbers<[1], [0], [0], [1], [0, 0, 1, 1], [], []>} : vector<32x128xbf16>, vector<128x128xbf16>, vector<32x128xf32> -> vector<32x128xf32>
    %c0_9 = arith.constant 0 : index
    %c0_10 = arith.constant 0 : index
    %18 = vector.load %arg5[%c0_9, %c0_10] : memref<1x128xf32, #tpu.memory_space<vmem>>, vector<1x128xf32>
    %19 = vector.broadcast %18 : vector<1x128xf32> to vector<32x128xf32>
    %20 = arith.addf %17, %19 : vector<32x128xf32>
    %c0_11 = arith.constant 0 : index
    %c0_12 = arith.constant 0 : index
    %21 = vector.load %arg6[%c0_11, %c0_12] : memref<32x128xf32, #tpu.memory_space<vmem>>, vector<32x128xf32>
    tpu.vector_store %arg6[%c0_11, %c0_12], %20 {strides = array<i32>} : memref<32x128xf32, #tpu.memory_space<vmem>>, vector<32x128xf32>,
    return
  }
  func.func @transform_0(%arg0: i32) -> (i32, i32) {
    %c0_i32 = arith.constant 0 : i32
    %c0_i32_0 = arith.constant 0 : i32
    return %arg0, %c0_i32 : i32, i32
  }
  func.func @transform_1(%arg0: i32) -> (i32, i32) {
    %c0_i32 = arith.constant 0 : i32
    %c0_i32_0 = arith.constant 0 : i32
    %c0_i32_1 = arith.constant 0 : i32
    return %c0_i32, %c0_i32_0 : i32, i32
  }
  func.func @transform_2(%arg0: i32) -> (i32, i32) {
    %c0_i32 = arith.constant 0 : i32
    %c0_i32_0 = arith.constant 0 : i32
    %c0_i32_1 = arith.constant 0 : i32
    return %c0_i32, %c0_i32_0 : i32, i32
  }
  func.func @transform_3(%arg0: i32) -> (i32, i32) {
    %c0_i32 = arith.constant 0 : i32
    %c0_i32_0 = arith.constant 0 : i32
    %c0_i32_1 = arith.constant 0 : i32
    return %c0_i32, %c0_i32_0 : i32, i32
  }
  func.func @transform_4(%arg0: i32) -> (i32, i32) {
    %c0_i32 = arith.constant 0 : i32
    %c0_i32_0 = arith.constant 0 : i32
    %c0_i32_1 = arith.constant 0 : i32
    return %c0_i32, %c0_i32_0 : i32, i32
  }
  func.func @transform_5(%arg0: i32) -> (i32, i32) {
    %c0_i32 = arith.constant 0 : i32
    %c0_i32_0 = arith.constant 0 : i32
    return %arg0, %c0_i32 : i32, i32
  }
}

</mosaic_0001>

<llo_original>
// kernel: tpu_custom_call.1
$region0: #{tpu_custom_call.1}
  #allocation0 [shape = 'u32[]', space=smem, size = 0x4, offset = 0x4, fixed_abs, tag = 'smem constant byte address 0x4 - core index']
  #allocation1 [shape = 'u32[72,128]{1,0:T(1,128)}', space=vmem, size = 0x9000, scoped, tag = 'internal scratch']
  %s0 = inlined_call_operand.hbm [shape: bf16[32,64], index: 0, kind: input, shape index: {}]
  %s1 = inlined_call_operand.hbm [shape: bf16[64,256], index: 1, kind: input, shape index: {}]
  %s2 = inlined_call_operand.hbm [shape: f32[1,256], index: 2, kind: input, shape index: {}]
  %s3 = inlined_call_operand.hbm [shape: bf16[128,128], index: 3, kind: input, shape index: {}]
  %s4 = inlined_call_operand.vmem [shape: f32[1,128], index: 4, kind: input, shape index: {}]
  %s5 = inlined_call_operand.hbm [shape: f32[32,128], index: 5, kind: output, shape index: {}]
  %s6 = sld [smem:[#allocation0]]
  $region46: #{tpu_custom_call.1} parent=0
    _
  %s8 = ssub.s32 1, %s6
  %s9 = scalar_select 0, %s8, %s6
  $region1: #{tpu_custom_call.1} parent=0
    #allocation2 [shape = 'u8[8192]{0}', space=vmem, size = 0x2000, scoped, tag = 'input window, operand 0, single buffered']
    #allocation3 [shape = 's32[1]{0}', space=sflag, size = 0x4, scoped, tag = 'scoped memory for tpu_custom_call.1']
    #allocation4 [shape = 's32[1]{0}', space=sflag, size = 0x4, scoped, tag = 'scoped memory for tpu_custom_call.1']
    #allocation5 [shape = 'u8[32768]{0}', space=vmem, size = 0x8000, scoped, tag = 'input window, operand 1, single buffered']
    #allocation6 [shape = 's32[1]{0}', space=sflag, size = 0x4, scoped, tag = 'scoped memory for tpu_custom_call.1']
    #allocation7 [shape = 'u8[1024]{0}', space=vmem, size = 0x400, scoped, tag = 'input window, operand 2, single buffered']
    #allocation8 [shape = 'u8[32768]{0}', space=vmem, size = 0x8000, scoped, tag = 'input window, operand 3, single buffered']
    #allocation9 [shape = 's32[1]{0}', space=sflag, size = 0x4, scoped, tag = 'scoped memory for tpu_custom_call.1']
    #allocation10 [shape = 'u8[16384]{0}', space=vmem, size = 0x4000, scoped, tag = 'output window, operand 0, single buffered']
    %10 = vsyncpa [#allocation3], 0
    %11 = vsyncpa [#allocation6], 0
    %12 = vsyncpa [#allocation9], 0
    %13 = vsyncpa [#allocation4], 0
    // Predicated region
    $region2: #{tpu_custom_call.1} parent=1 // pred_check
      _
    $region3: #{tpu_custom_call.1} parent=1 // pred_check_branch
      %15 = sbr.rel (0) target = $region5
    $region4: #{tpu_custom_call.1} parent=1 // pred_region
      %17 = vsyncadd [#allocation3], 0
      %s18 = sshll.u32 %s0, 4
      %s19 = int_to_ptr.hbm [resolvable:$true] %s18
      %s20 = sshll.u32 [#allocation2], 4
      %s21 = int_to_ptr.vmem [resolvable:$true] %s20
      %26 = dma.hbm_to_vmem [thread:$0]  %s19, 256, %s21, [#allocation3], 64, 64, 4
    $region5: #{tpu_custom_call.1} parent=1 // pred_fallthru
      _
    // Predicated region
    $region6: #{tpu_custom_call.1} parent=1 // pred_check
      _
    $region7: #{tpu_custom_call.1} parent=1 // pred_check_branch
      %28 = sbr.rel (0) target = $region9
    $region8: #{tpu_custom_call.1} parent=1 // pred_region
      %30 = vsyncadd [#allocation6], 0
      %s31 = sshll.u32 %s1, 4
      %s32 = int_to_ptr.hbm [resolvable:$true] %s31
      %s33 = sshll.u32 [#allocation5], 4
      %s34 = int_to_ptr.vmem [resolvable:$true] %s33
      %39 = dma.hbm_to_vmem [thread:$0]  %s32, 1024, %s34, [#allocation6], 128, 128, 8
    $region9: #{tpu_custom_call.1} parent=1 // pred_fallthru
      _
    // Predicated region
    $region10: #{tpu_custom_call.1} parent=1 // pred_check
      _
    $region11: #{tpu_custom_call.1} parent=1 // pred_check_branch
      %41 = sbr.rel (0) target = $region13
    $region12: #{tpu_custom_call.1} parent=1 // pred_region
      %43 = vsyncadd [#allocation6], 0
      %s45 = sshll.u32 %s2, 4
      %s46 = int_to_ptr.hbm [resolvable:$true] %s45
      %s47 = sshll.u32 [#allocation7], 4
      %s48 = int_to_ptr.vmem [resolvable:$true] %s47
      %50 = dma.hbm_to_vmem [thread:$0]  %s46, 32, %s48, [#allocation6]
    $region13: #{tpu_custom_call.1} parent=1 // pred_fallthru
      _
    // Predicated region
    $region14: #{tpu_custom_call.1} parent=1 // pred_check
      _
    $region15: #{tpu_custom_call.1} parent=1 // pred_check_branch
      %52 = sbr.rel (0) target = $region17
    $region16: #{tpu_custom_call.1} parent=1 // pred_region
      %54 = vsyncadd [#allocation9], 0
      %s55 = sshll.u32 %s3, 4
      %s56 = int_to_ptr.hbm [resolvable:$true] %s55
      %s57 = sshll.u32 [#allocation8], 4
      %s58 = int_to_ptr.vmem [resolvable:$true] %s57
      %63 = dma.hbm_to_vmem [thread:$0]  %s56, 1024, %s58, [#allocation9], 64, 64, 4
    $region17: #{tpu_custom_call.1} parent=1 // pred_fallthru
      _
    // Predicated region
    $region18: #{tpu_custom_call.1} parent=1 // pred_check
      _
    $region19: #{tpu_custom_call.1} parent=1 // pred_check_branch
      %65 = sbr.rel (0) target = $region21
    $region20: #{tpu_custom_call.1} parent=1 // pred_region
      _
    $region21: #{tpu_custom_call.1} parent=1 // pred_fallthru
      _
    // Predicated region
    $region22: #{tpu_custom_call.1} parent=1 // pred_check
      _
    $region23: #{tpu_custom_call.1} parent=1 // pred_check_branch
      %67 = sbr.rel (0) target = $region25
    $region24: #{tpu_custom_call.1} parent=1 // pred_region
      %69 = dma.done [#allocation3], 256
    $region25: #{tpu_custom_call.1} parent=1 // pred_fallthru
      _
    // Predicated region
    $region26: #{tpu_custom_call.1} parent=1 // pred_check
      _
    $region27: #{tpu_custom_call.1} parent=1 // pred_check_branch
      %71 = sbr.rel (0) target = $region29
    $region28: #{tpu_custom_call.1} parent=1 // pred_region
      %73 = dma.done [#allocation6], 1024
    $region29: #{tpu_custom_call.1} parent=1 // pred_fallthru
      _
    // Predicated region
    $region30: #{tpu_custom_call.1} parent=1 // pred_check
      _
    $region31: #{tpu_custom_call.1} parent=1 // pred_check_branch
      %75 = sbr.rel (0) target = $region33
    $region32: #{tpu_custom_call.1} parent=1 // pred_region
      %77 = dma.done [#allocation6], 32
    $region33: #{tpu_custom_call.1} parent=1 // pred_fallthru
      _
    // Predicated region
    $region34: #{tpu_custom_call.1} parent=1 // pred_check
      _
    $region35: #{tpu_custom_call.1} parent=1 // pred_check_branch
      %79 = sbr.rel (0) target = $region37
    $region36: #{tpu_custom_call.1} parent=1 // pred_region
      %81 = dma.done [#allocation9], 1024
    $region37: #{tpu_custom_call.1} parent=1 // pred_fallthru
      _
    %v83 = vld [vmem:[#allocation2] sm:$0xf]
    %v84 = vld [vmem:[#allocation2 + $0x4] sm:$0xf]
    %v85 = vld [vmem:[#allocation2 + $0x8] sm:$0xf]
    %v86 = vld [vmem:[#allocation2 + $0xc] sm:$0xf]
    %v87 = vld [vmem:[#allocation5] sm:$0xff]
    %v88 = vld [vmem:[#allocation5 + $0x8] sm:$0xff]
    %v89 = vld [vmem:[#allocation5 + $0x10] sm:$0xff]
    %v90 = vld [vmem:[#allocation5 + $0x18] sm:$0xff]
    %v91 = vld [vmem:[#allocation5 + $0x20] sm:$0xff]
    %v92 = vld [vmem:[#allocation5 + $0x28] sm:$0xff]
    %v93 = vld [vmem:[#allocation5 + $0x30] sm:$0xff]
    %v94 = vld [vmem:[#allocation5 + $0x38] sm:$0xff]
    %v95 = vld [vmem:[#allocation7] sm:$0x3]
    %v97 = vperm.slane %v95, 0
    %v98 = vperm.slane %v95, 1
    %v105 = vunpack.c.l.b16 %v83
    %v106 = vunpack.c.l.b16 %v84
    %v107 = vunpack.c.l.b16 %v85
    %v108 = vunpack.c.l.b16 %v86
    %v109 = vpack.c.b16 %v106, %v105
    %v110 = vpack.c.b16 %v108, %v107
    %v119 = vunpack.c.l.b16 %v87
    %v120 = vunpack.c.h.b16 %v87
    %v121 = vunpack.c.l.b16 %v88
    %v122 = vunpack.c.h.b16 %v88
    %v123 = vunpack.c.l.b16 %v89
    %v124 = vunpack.c.h.b16 %v89
    %v125 = vunpack.c.l.b16 %v90
    %v126 = vunpack.c.h.b16 %v90
    %v127 = vunpack.c.l.b16 %v91
    %v128 = vunpack.c.h.b16 %v91
    %v129 = vunpack.c.l.b16 %v92
    %v130 = vunpack.c.h.b16 %v92
    %v131 = vunpack.c.l.b16 %v93
    %v132 = vunpack.c.h.b16 %v93
    %v133 = vunpack.c.l.b16 %v94
    %v134 = vunpack.c.h.b16 %v94
    %v135 = vpack.c.b16 %v121, %v119
    %v136 = vpack.c.b16 %v122, %v120
    %v137 = vpack.c.b16 %v125, %v123
    %v138 = vpack.c.b16 %v126, %v124
    %v139 = vpack.c.b16 %v129, %v127
    %v140 = vpack.c.b16 %v130, %v128
    %v141 = vpack.c.b16 %v133, %v131
    %v142 = vpack.c.b16 %v134, %v132
    %vm151 = vcmask 523264
    %v153 = vsel %vm151, %v109, 0
    %v156 = vsel %vm151, %v110, 0
    %158 = vmatpush.bf16.msra.mxu0 0
    %159 = vmatpush.bf16.msra.mxu0 0
    %160 = vmatpush.bf16.msra.mxu0 0
    %161 = vmatpush.bf16.msra.mxu0 0
    %162 = vmatpush.bf16.msra.mxu0 %v141
    %163 = vmatpush.bf16.msra.mxu0 %v139
    %164 = vmatpush.bf16.msra.mxu0 %v137
    %165 = vmatpush.bf16.msra.mxu0 %v135
    %166 = vmatmul.bf16.gmra.mxu0 %v153
    %v167 = vpop.f32.mrf.mxu0
    %v168 = vadd.f32 %v97, %v167
    %v169 = vpop.f32.mrf.mxu0
    %v170 = vadd.f32 %v97, %v169
    %171 = vmatmul.bf16.gmra.mxu0 %v156
    %v172 = vpop.f32.mrf.mxu0
    %v173 = vadd.f32 %v97, %v172
    %v174 = vpop.f32.mrf.mxu0
    %v175 = vadd.f32 %v97, %v174
    %176 = vdwg.mxu0
    %177 = vmatpush.bf16.msra.mxu0 0
    %178 = vmatpush.bf16.msra.mxu0 0
    %179 = vmatpush.bf16.msra.mxu0 0
    %180 = vmatpush.bf16.msra.mxu0 0
    %181 = vmatpush.bf16.msra.mxu0 %v142
    %182 = vmatpush.bf16.msra.mxu0 %v140
    %183 = vmatpush.bf16.msra.mxu0 %v138
    %184 = vmatpush.bf16.msra.mxu0 %v136
    %185 = vmatmul.bf16.gmra.mxu0 %v153
    %v186 = vpop.f32.mrf.mxu0
    %v187 = vadd.f32 %v98, %v186
    %v188 = vpop.f32.mrf.mxu0
    %v189 = vadd.f32 %v98, %v188
    %190 = vmatmul.bf16.gmra.mxu0 %v156
    %v191 = vpop.f32.mrf.mxu0
    %v192 = vadd.f32 %v98, %v191
    %v193 = vpop.f32.mrf.mxu0
    %v194 = vadd.f32 %v98, %v193
    %195 = vdwg.mxu0
    %v196 = vtanh.pop %v168
    %v197 = vtanh.pop %v170
    %v198 = vtanh.pop %v173
    %v199 = vtanh.pop %v175
    %v200 = vxor.u32 %v187, 2147483648
    %v201 = vxor.u32 %v189, 2147483648
    %v202 = vxor.u32 %v192, 2147483648
    %v203 = vxor.u32 %v194, 2147483648
    %v204 = vmul.f32 %v200, 1.442695
    %v205 = vpow.pop %v204
    %v206 = vmul.f32 %v201, 1.442695
    %v207 = vpow.pop %v206
    %v208 = vmul.f32 %v202, 1.442695
    %v209 = vpow.pop %v208
    %v210 = vmul.f32 %v203, 1.442695
    %v211 = vpow.pop %v210
    %v212 = vadd.f32 %v205, 1.0
    %v213 = vadd.f32 %v207, 1.0
    %v214 = vadd.f32 %v209, 1.0
    %v215 = vadd.f32 %v211, 1.0
    %v216 = vrcp.pop %v212
    %v217 = vmul.f32 %v212, %v216
    %v218 = vsub.f32 1.0, %v217
    %v219 = vmul.f32 %v216, %v218
    %v220 = vadd.f32 %v216, %v219
    %vm221 = vweird.f32 %v212
    %vm222 = vweird.f32 %v216
    %vm223 = vmor %vm221, %vm222
    %v224 = vsel %vm223, %v216, %v220
    %v225 = vand.u32 2147483647, %v212
    %vm226 = vcmp.eq.f32.partialorder %v225, 8.507059e+37
    %v227 = vand.u32 %v212, 2147483648
    %v228 = vor.u32 1.1754944e-38, %v227
    %v229 = vsel %vm226, %v228, %v224
    %v230 = vmul.f32 1.0, %v229
    %v231 = vrcp.pop %v213
    %v232 = vmul.f32 %v213, %v231
    %v233 = vsub.f32 1.0, %v232
    %v234 = vmul.f32 %v231, %v233
    %v235 = vadd.f32 %v231, %v234
    %vm236 = vweird.f32 %v213
    %vm237 = vweird.f32 %v231
    %vm238 = vmor %vm236, %vm237
    %v239 = vsel %vm238, %v231, %v235
    %v240 = vand.u32 2147483647, %v213
    %vm241 = vcmp.eq.f32.partialorder %v240, 8.507059e+37
    %v242 = vand.u32 %v213, 2147483648
    %v243 = vor.u32 1.1754944e-38, %v242
    %v244 = vsel %vm241, %v243, %v239
    %v245 = vmul.f32 1.0, %v244
    %v246 = vrcp.pop %v214
    %v247 = vmul.f32 %v214, %v246
    %v248 = vsub.f32 1.0, %v247
    %v249 = vmul.f32 %v246, %v248
    %v250 = vadd.f32 %v246, %v249
    %vm251 = vweird.f32 %v214
    %vm252 = vweird.f32 %v246
    %vm253 = vmor %vm251, %vm252
    %v254 = vsel %vm253, %v246, %v250
    %v255 = vand.u32 2147483647, %v214
    %vm256 = vcmp.eq.f32.partialorder %v255, 8.507059e+37
    %v257 = vand.u32 %v214, 2147483648
    %v258 = vor.u32 1.1754944e-38, %v257
    %v259 = vsel %vm256, %v258, %v254
    %v260 = vmul.f32 1.0, %v259
    %v261 = vrcp.pop %v215
    %v262 = vmul.f32 %v215, %v261
    %v263 = vsub.f32 1.0, %v262
    %v264 = vmul.f32 %v261, %v263
    %v265 = vadd.f32 %v261, %v264
    %vm266 = vweird.f32 %v215
    %vm267 = vweird.f32 %v261
    %vm268 = vmor %vm266, %vm267
    %v269 = vsel %vm268, %v261, %v265
    %v270 = vand.u32 2147483647, %v215
    %vm271 = vcmp.eq.f32.partialorder %v270, 8.507059e+37
    %v272 = vand.u32 %v215, 2147483648
    %v273 = vor.u32 1.1754944e-38, %v272
    %v274 = vsel %vm271, %v273, %v269
    %v275 = vmul.f32 1.0, %v274
    %v276 = vmul.f32 %v196, %v230
    %v277 = vmul.f32 %v197, %v245
    %v278 = vmul.f32 %v198, %v260
    %v279 = vmul.f32 %v199, %v275
    %v280 = vpack.c.bf16 %v277, %v276
    %v281 = vpack.c.bf16 %v279, %v278
    %v282 = vld [vmem:[#allocation8] sm:$0xf]
    %v283 = vld [vmem:[#allocation8 + $0x4] sm:$0xf]
    %v284 = vld [vmem:[#allocation8 + $0x8] sm:$0xf]
    %v285 = vld [vmem:[#allocation8 + $0xc] sm:$0xf]
    %v286 = vld [vmem:[#allocation8 + $0x10] sm:$0xf]
    %v287 = vld [vmem:[#allocation8 + $0x14] sm:$0xf]
    %v288 = vld [vmem:[#allocation8 + $0x18] sm:$0xf]
    %v289 = vld [vmem:[#allocation8 + $0x1c] sm:$0xf]
    %v290 = vld [vmem:[#allocation8 + $0x20] sm:$0xf]
    %v291 = vld [vmem:[#allocation8 + $0x24] sm:$0xf]
    %v292 = vld [vmem:[#allocation8 + $0x28] sm:$0xf]
    %v293 = vld [vmem:[#allocation8 + $0x2c] sm:$0xf]
    %v294 = vld [vmem:[#allocation8 + $0x30] sm:$0xf]
    %v295 = vld [vmem:[#allocation8 + $0x34] sm:$0xf]
    %v296 = vld [vmem:[#allocation8 + $0x38] sm:$0xf]
    %v297 = vld [vmem:[#allocation8 + $0x3c] sm:$0xf]
    %v298 = vld [vmem:[%s4] sm:$0x1]
    %v300 = vperm.slane %v298, 0
    %v318 = vunpack.c.l.b16 %v282
    %v319 = vunpack.c.l.b16 %v283
    %v320 = vunpack.c.l.b16 %v284
    %v321 = vunpack.c.l.b16 %v285
    %v322 = vunpack.c.l.b16 %v286
    %v323 = vunpack.c.l.b16 %v287
    %v324 = vunpack.c.l.b16 %v288
    %v325 = vunpack.c.l.b16 %v289
    %v326 = vunpack.c.l.b16 %v290
    %v327 = vunpack.c.l.b16 %v291
    %v328 = vunpack.c.l.b16 %v292
    %v329 = vunpack.c.l.b16 %v293
    %v330 = vunpack.c.l.b16 %v294
    %v331 = vunpack.c.l.b16 %v295
    %v332 = vunpack.c.l.b16 %v296
    %v333 = vunpack.c.l.b16 %v297
    %v334 = vpack.c.b16 %v319, %v318
    %v335 = vpack.c.b16 %v321, %v320
    %v336 = vpack.c.b16 %v323, %v322
    %v337 = vpack.c.b16 %v325, %v324
    %v338 = vpack.c.b16 %v327, %v326
    %v339 = vpack.c.b16 %v329, %v328
    %v340 = vpack.c.b16 %v331, %v330
    %v341 = vpack.c.b16 %v333, %v332
    %350 = vmatpush.bf16.msra.mxu0 %v341
    %351 = vmatpush.bf16.msra.mxu0 %v340
    %352 = vmatpush.bf16.msra.mxu0 %v339
    %353 = vmatpush.bf16.msra.mxu0 %v338
    %354 = vmatpush.bf16.msra.mxu0 %v337
    %355 = vmatpush.bf16.msra.mxu0 %v336
    %356 = vmatpush.bf16.msra.mxu0 %v335
    %357 = vmatpush.bf16.msra.mxu0 %v334
    %358 = vmatmul.bf16.gmra.mxu0 %v280
    %v359 = vpop.f32.mrf.mxu0
    %v360 = vadd.f32 %v300, %v359
    %v361 = vpop.f32.mrf.mxu0
    %v362 = vadd.f32 %v300, %v361
    %363 = vmatmul.bf16.gmra.mxu0 %v281
    %v364 = vpop.f32.mrf.mxu0
    %v365 = vadd.f32 %v300, %v364
    %v366 = vpop.f32.mrf.mxu0
    %v367 = vadd.f32 %v300, %v366
    %368 = vdwg.mxu0
    %369 = vst [vmem:[#allocation10] sm:$0xff] %v360
    %370 = vst [vmem:[#allocation10 + $0x8] sm:$0xff] %v362
    %371 = vst [vmem:[#allocation10 + $0x10] sm:$0xff] %v365
    %372 = vst [vmem:[#allocation10 + $0x18] sm:$0xff] %v367
    // Predicated region
    $region38: #{tpu_custom_call.1} parent=1 // pred_check
      _
    $region39: #{tpu_custom_call.1} parent=1 // pred_check_branch
      %374 = sbr.rel (0) target = $region41
    $region40: #{tpu_custom_call.1} parent=1 // pred_region
      %376 = vsyncadd [#allocation4], 0
      %s377 = sshll.u32 [#allocation10], 4
      %s378 = int_to_ptr.vmem [resolvable:$true] %s377
      %s379 = sshll.u32 %s5, 4
      %s380 = int_to_ptr.hbm [resolvable:$true] %s379
      %385 = dma.vmem_to_hbm [thread:$0]  %s378, 512, %s380, [#allocation4], 128, 128, 8
    $region41: #{tpu_custom_call.1} parent=1 // pred_fallthru
      _
    // Predicated region
    $region42: #{tpu_custom_call.1} parent=1 // pred_check
      _
    $region43: #{tpu_custom_call.1} parent=1 // pred_check_branch
      %387 = sbr.rel (0) target = $region45
    $region44: #{tpu_custom_call.1} parent=1 // pred_region
      %389 = dma.done [#allocation4], 512
    $region45: #{tpu_custom_call.1} parent=1 // pred_fallthru
      _
    %390 = vsyncpa [#allocation3], 1
    %391 = vsyncpa [#allocation6], 1
    %392 = vsyncpa [#allocation9], 1
    %393 = vsyncpa [#allocation4], 1

// kernel: tpu_custom_call.1
$region0: #{tpu_custom_call.1}
  #allocation0 [shape = 'u32[]', space=smem, size = 0x4, offset = 0x4, fixed_abs, tag = 'smem constant byte address 0x4 - core index']
  #allocation1 [shape = 'u32[72,128]{1,0:T(1,128)}', space=vmem, size = 0x9000, scoped, tag = 'internal scratch']
  %s0 = inlined_call_operand.hbm [shape: bf16[32,64], index: 0, kind: input, shape index: {}]
  %s1 = inlined_call_operand.hbm [shape: bf16[64,256], index: 1, kind: input, shape index: {}]
  %s2 = inlined_call_operand.hbm [shape: f32[1,256], index: 2, kind: input, shape index: {}]
  %s3 = inlined_call_operand.hbm [shape: bf16[128,128], index: 3, kind: input, shape index: {}]
  %s4 = inlined_call_operand.vmem [shape: f32[1,128], index: 4, kind: input, shape index: {}]
  %s5 = inlined_call_operand.hbm [shape: f32[32,128], index: 5, kind: output, shape index: {}]
  %s6 = sld [smem:[#allocation0]]
  $region46: #{tpu_custom_call.1} parent=0
    _
  %s8 = ssub.s32 1, %s6
  %s9 = scalar_select 0, %s8, %s6
  $region1: #{tpu_custom_call.1} parent=0
    #allocation2 [shape = 'u8[8192]{0}', space=vmem, size = 0x2000, scoped, tag = 'input window, operand 0, single buffered']
    #allocation3 [shape = 's32[1]{0}', space=sflag, size = 0x4, scoped, tag = 'scoped memory for tpu_custom_call.1']
    #allocation4 [shape = 's32[1]{0}', space=sflag, size = 0x4, scoped, tag = 'scoped memory for tpu_custom_call.1']
    #allocation5 [shape = 'u8[32768]{0}', space=vmem, size = 0x8000, scoped, tag = 'input window, operand 1, single buffered']
    #allocation6 [shape = 's32[1]{0}', space=sflag, size = 0x4, scoped, tag = 'scoped memory for tpu_custom_call.1']
    #allocation7 [shape = 'u8[1024]{0}', space=vmem, size = 0x400, scoped, tag = 'input window, operand 2, single buffered']
    #allocation8 [shape = 'u8[32768]{0}', space=vmem, size = 0x8000, scoped, tag = 'input window, operand 3, single buffered']
    #allocation9 [shape = 's32[1]{0}', space=sflag, size = 0x4, scoped, tag = 'scoped memory for tpu_custom_call.1']
    #allocation10 [shape = 'u8[16384]{0}', space=vmem, size = 0x4000, scoped, tag = 'output window, operand 0, single buffered']
    %10 = vsyncpa [#allocation3], 0
    %11 = vsyncpa [#allocation6], 0
    %12 = vsyncpa [#allocation9], 0
    %13 = vsyncpa [#allocation4], 0
    // Predicated region
    $region2: #{tpu_custom_call.1} parent=1 // pred_check
      _
    $region3: #{tpu_custom_call.1} parent=1 // pred_check_branch
      %15 = sbr.rel (0) target = $region5
    $region4: #{tpu_custom_call.1} parent=1 // pred_region
      %17 = vsyncadd [#allocation3], 0
      %s18 = sshll.u32 %s0, 4
      %s19 = int_to_ptr.hbm [resolvable:$true] %s18
      %s20 = sshll.u32 [#allocation2], 4
      %s21 = int_to_ptr.vmem [resolvable:$true] %s20
      %26 = dma.hbm_to_vmem [thread:$0]  %s19, 256, %s21, [#allocation3], 64, 64, 4
    $region5: #{tpu_custom_call.1} parent=1 // pred_fallthru
      _
    // Predicated region
    $region6: #{tpu_custom_call.1} parent=1 // pred_check
      _
    $region7: #{tpu_custom_call.1} parent=1 // pred_check_branch
      %28 = sbr.rel (0) target = $region9
    $region8: #{tpu_custom_call.1} parent=1 // pred_region
      %30 = vsyncadd [#allocation6], 0
      %s31 = sshll.u32 %s1, 4
      %s32 = int_to_ptr.hbm [resolvable:$true] %s31
      %s33 = sshll.u32 [#allocation5], 4
      %s34 = int_to_ptr.vmem [resolvable:$true] %s33
      %39 = dma.hbm_to_vmem [thread:$0]  %s32, 1024, %s34, [#allocation6], 128, 128, 8
    $region9: #{tpu_custom_call.1} parent=1 // pred_fallthru
      _
    // Predicated region
    $region10: #{tpu_custom_call.1} parent=1 // pred_check
      _
    $region11: #{tpu_custom_call.1} parent=1 // pred_check_branch
      %41 = sbr.rel (0) target = $region13
    $region12: #{tpu_custom_call.1} parent=1 // pred_region
      %43 = vsyncadd [#allocation6], 0
      %s45 = sshll.u32 %s2, 4
      %s46 = int_to_ptr.hbm [resolvable:$true] %s45
      %s47 = sshll.u32 [#allocation7], 4
      %s48 = int_to_ptr.vmem [resolvable:$true] %s47
      %50 = dma.hbm_to_vmem [thread:$0]  %s46, 32, %s48, [#allocation6]
    $region13: #{tpu_custom_call.1} parent=1 // pred_fallthru
      _
    // Predicated region
    $region14: #{tpu_custom_call.1} parent=1 // pred_check
      _
    $region15: #{tpu_custom_call.1} parent=1 // pred_check_branch
      %52 = sbr.rel (0) target = $region17
    $region16: #{tpu_custom_call.1} parent=1 // pred_region
      %54 = vsyncadd [#allocation9], 0
      %s55 = sshll.u32 %s3, 4
      %s56 = int_to_ptr.hbm [resolvable:$true] %s55
      %s57 = sshll.u32 [#allocation8], 4
      %s58 = int_to_ptr.vmem [resolvable:$true] %s57
      %63 = dma.hbm_to_vmem [thread:$0]  %s56, 1024, %s58, [#allocation9], 64, 64, 4
    $region17: #{tpu_custom_call.1} parent=1 // pred_fallthru
      _
    // Predicated region
    $region18: #{tpu_custom_call.1} parent=1 // pred_check
      _
    $region19: #{tpu_custom_call.1} parent=1 // pred_check_branch
      %65 = sbr.rel (0) target = $region21
    $region20: #{tpu_custom_call.1} parent=1 // pred_region
      _
    $region21: #{tpu_custom_call.1} parent=1 // pred_fallthru
      _
    // Predicated region
    $region22: #{tpu_custom_call.1} parent=1 // pred_check
      _
    $region23: #{tpu_custom_call.1} parent=1 // pred_check_branch
      %67 = sbr.rel (0) target = $region25
    $region24: #{tpu_custom_call.1} parent=1 // pred_region
      %69 = dma.done [#allocation3], 256
    $region25: #{tpu_custom_call.1} parent=1 // pred_fallthru
      _
    // Predicated region
    $region26: #{tpu_custom_call.1} parent=1 // pred_check
      _
    $region27: #{tpu_custom_call.1} parent=1 // pred_check_branch
      %71 = sbr.rel (0) target = $region29
    $region28: #{tpu_custom_call.1} parent=1 // pred_region
      %73 = dma.done [#allocation6], 1024
    $region29: #{tpu_custom_call.1} parent=1 // pred_fallthru
      _
    // Predicated region
    $region30: #{tpu_custom_call.1} parent=1 // pred_check
      _
    $region31: #{tpu_custom_call.1} parent=1 // pred_check_branch
      %75 = sbr.rel (0) target = $region33
    $region32: #{tpu_custom_call.1} parent=1 // pred_region
      %77 = dma.done [#allocation6], 32
    $region33: #{tpu_custom_call.1} parent=1 // pred_fallthru
      _
    // Predicated region
    $region34: #{tpu_custom_call.1} parent=1 // pred_check
      _
    $region35: #{tpu_custom_call.1} parent=1 // pred_check_branch
      %79 = sbr.rel (0) target = $region37
    $region36: #{tpu_custom_call.1} parent=1 // pred_region
      %81 = dma.done [#allocation9], 1024
    $region37: #{tpu_custom_call.1} parent=1 // pred_fallthru
      _
    %v83 = vld [vmem:[#allocation2] sm:$0xf]
    %v84 = vld [vmem:[#allocation2 + $0x4] sm:$0xf]
    %v85 = vld [vmem:[#allocation2 + $0x8] sm:$0xf]
    %v86 = vld [vmem:[#allocation2 + $0xc] sm:$0xf]
    %v87 = vld [vmem:[#allocation5] sm:$0xff]
    %v88 = vld [vmem:[#allocation5 + $0x8] sm:$0xff]
    %v89 = vld [vmem:[#allocation5 + $0x10] sm:$0xff]
    %v90 = vld [vmem:[#allocation5 + $0x18] sm:$0xff]
    %v91 = vld [vmem:[#allocation5 + $0x20] sm:$0xff]
    %v92 = vld [vmem:[#allocation5 + $0x28] sm:$0xff]
    %v93 = vld [vmem:[#allocation5 + $0x30] sm:$0xff]
    %v94 = vld [vmem:[#allocation5 + $0x38] sm:$0xff]
    %v95 = vld [vmem:[#allocation7] sm:$0x3]
    %v97 = vperm.slane %v95, 0
    %v98 = vperm.slane %v95, 1
    %v105 = vunpack.c.l.b16 %v83
    %v106 = vunpack.c.l.b16 %v84
    %v107 = vunpack.c.l.b16 %v85
    %v108 = vunpack.c.l.b16 %v86
    %v109 = vpack.c.b16 %v106, %v105
    %v110 = vpack.c.b16 %v108, %v107
    %v119 = vunpack.c.l.b16 %v87
    %v120 = vunpack.c.h.b16 %v87
    %v121 = vunpack.c.l.b16 %v88
    %v122 = vunpack.c.h.b16 %v88
    %v123 = vunpack.c.l.b16 %v89
    %v124 = vunpack.c.h.b16 %v89
    %v125 = vunpack.c.l.b16 %v90
    %v126 = vunpack.c.h.b16 %v90
    %v127 = vunpack.c.l.b16 %v91
    %v128 = vunpack.c.h.b16 %v91
    %v129 = vunpack.c.l.b16 %v92
    %v130 = vunpack.c.h.b16 %v92
    %v131 = vunpack.c.l.b16 %v93
    %v132 = vunpack.c.h.b16 %v93
    %v133 = vunpack.c.l.b16 %v94
    %v134 = vunpack.c.h.b16 %v94
    %v135 = vpack.c.b16 %v121, %v119
    %v136 = vpack.c.b16 %v122, %v120
    %v137 = vpack.c.b16 %v125, %v123
    %v138 = vpack.c.b16 %v126, %v124
    %v139 = vpack.c.b16 %v129, %v127
    %v140 = vpack.c.b16 %v130, %v128
    %v141 = vpack.c.b16 %v133, %v131
    %v142 = vpack.c.b16 %v134, %v132
    %vm151 = vcmask 523264
    %v153 = vsel %vm151, %v109, 0
    %v156 = vsel %vm151, %v110, 0
    %158 = vmatpush.bf16.msra.mxu0 0
    %159 = vmatpush.bf16.msra.mxu0 0
    %160 = vmatpush.bf16.msra.mxu0 0
    %161 = vmatpush.bf16.msra.mxu0 0
    %162 = vmatpush.bf16.msra.mxu0 %v141
    %163 = vmatpush.bf16.msra.mxu0 %v139
    %164 = vmatpush.bf16.msra.mxu0 %v137
    %165 = vmatpush.bf16.msra.mxu0 %v135
    %166 = vmatmul.bf16.gmra.mxu0 %v153
    %v167 = vpop.f32.mrf.mxu0
    %v168 = vadd.f32 %v97, %v167
    %v169 = vpop.f32.mrf.mxu0
    %v170 = vadd.f32 %v97, %v169
    %171 = vmatmul.bf16.gmra.mxu0 %v156
    %v172 = vpop.f32.mrf.mxu0
    %v173 = vadd.f32 %v97, %v172
    %v174 = vpop.f32.mrf.mxu0
    %v175 = vadd.f32 %v97, %v174
    %176 = vdwg.mxu0
    %177 = vmatpush.bf16.msra.mxu0 0
    %178 = vmatpush.bf16.msra.mxu0 0
    %179 = vmatpush.bf16.msra.mxu0 0
    %180 = vmatpush.bf16.msra.mxu0 0
    %181 = vmatpush.bf16.msra.mxu0 %v142
    %182 = vmatpush.bf16.msra.mxu0 %v140
    %183 = vmatpush.bf16.msra.mxu0 %v138
    %184 = vmatpush.bf16.msra.mxu0 %v136
    %185 = vmatmul.bf16.gmra.mxu0 %v153
    %v186 = vpop.f32.mrf.mxu0
    %v187 = vadd.f32 %v98, %v186
    %v188 = vpop.f32.mrf.mxu0
    %v189 = vadd.f32 %v98, %v188
    %190 = vmatmul.bf16.gmra.mxu0 %v156
    %v191 = vpop.f32.mrf.mxu0
    %v192 = vadd.f32 %v98, %v191
    %v193 = vpop.f32.mrf.mxu0
    %v194 = vadd.f32 %v98, %v193
    %195 = vdwg.mxu0
    %v196 = vtanh.pop %v168
    %v197 = vtanh.pop %v170
    %v198 = vtanh.pop %v173
    %v199 = vtanh.pop %v175
    %v200 = vxor.u32 %v187, 2147483648
    %v201 = vxor.u32 %v189, 2147483648
    %v202 = vxor.u32 %v192, 2147483648
    %v203 = vxor.u32 %v194, 2147483648
    %v204 = vmul.f32 %v200, 1.442695
    %v205 = vpow.pop %v204
    %v206 = vmul.f32 %v201, 1.442695
    %v207 = vpow.pop %v206
    %v208 = vmul.f32 %v202, 1.442695
    %v209 = vpow.pop %v208
    %v210 = vmul.f32 %v203, 1.442695
    %v211 = vpow.pop %v210
    %v212 = vadd.f32 %v205, 1.0
    %v213 = vadd.f32 %v207, 1.0
    %v214 = vadd.f32 %v209, 1.0
    %v215 = vadd.f32 %v211, 1.0
    %v216 = vrcp.pop %v212
    %v217 = vmul.f32 %v212, %v216
    %v218 = vsub.f32 1.0, %v217
    %v219 = vmul.f32 %v216, %v218
    %v220 = vadd.f32 %v216, %v219
    %vm221 = vweird.f32 %v212
    %vm222 = vweird.f32 %v216
    %vm223 = vmor %vm221, %vm222
    %v224 = vsel %vm223, %v216, %v220
    %v225 = vand.u32 2147483647, %v212
    %vm226 = vcmp.eq.f32.partialorder %v225, 8.507059e+37
    %v227 = vand.u32 %v212, 2147483648
    %v228 = vor.u32 1.1754944e-38, %v227
    %v229 = vsel %vm226, %v228, %v224
    %v230 = vmul.f32 1.0, %v229
    %v231 = vrcp.pop %v213
    %v232 = vmul.f32 %v213, %v231
    %v233 = vsub.f32 1.0, %v232
    %v234 = vmul.f32 %v231, %v233
    %v235 = vadd.f32 %v231, %v234
    %vm236 = vweird.f32 %v213
    %vm237 = vweird.f32 %v231
    %vm238 = vmor %vm236, %vm237
    %v239 = vsel %vm238, %v231, %v235
    %v240 = vand.u32 2147483647, %v213
    %vm241 = vcmp.eq.f32.partialorder %v240, 8.507059e+37
    %v242 = vand.u32 %v213, 2147483648
    %v243 = vor.u32 1.1754944e-38, %v242
    %v244 = vsel %vm241, %v243, %v239
    %v245 = vmul.f32 1.0, %v244
    %v246 = vrcp.pop %v214
    %v247 = vmul.f32 %v214, %v246
    %v248 = vsub.f32 1.0, %v247
    %v249 = vmul.f32 %v246, %v248
    %v250 = vadd.f32 %v246, %v249
    %vm251 = vweird.f32 %v214
    %vm252 = vweird.f32 %v246
    %vm253 = vmor %vm251, %vm252
    %v254 = vsel %vm253, %v246, %v250
    %v255 = vand.u32 2147483647, %v214
    %vm256 = vcmp.eq.f32.partialorder %v255, 8.507059e+37
    %v257 = vand.u32 %v214, 2147483648
    %v258 = vor.u32 1.1754944e-38, %v257
    %v259 = vsel %vm256, %v258, %v254
    %v260 = vmul.f32 1.0, %v259
    %v261 = vrcp.pop %v215
    %v262 = vmul.f32 %v215, %v261
    %v263 = vsub.f32 1.0, %v262
    %v264 = vmul.f32 %v261, %v263
    %v265 = vadd.f32 %v261, %v264
    %vm266 = vweird.f32 %v215
    %vm267 = vweird.f32 %v261
    %vm268 = vmor %vm266, %vm267
    %v269 = vsel %vm268, %v261, %v265
    %v270 = vand.u32 2147483647, %v215
    %vm271 = vcmp.eq.f32.partialorder %v270, 8.507059e+37
    %v272 = vand.u32 %v215, 2147483648
    %v273 = vor.u32 1.1754944e-38, %v272
    %v274 = vsel %vm271, %v273, %v269
    %v275 = vmul.f32 1.0, %v274
    %v276 = vmul.f32 %v196, %v230
    %v277 = vmul.f32 %v197, %v245
    %v278 = vmul.f32 %v198, %v260
    %v279 = vmul.f32 %v199, %v275
    %v280 = vpack.c.bf16 %v277, %v276
    %v281 = vpack.c.bf16 %v279, %v278
    %v282 = vld [vmem:[#allocation8] sm:$0xf]
    %v283 = vld [vmem:[#allocation8 + $0x4] sm:$0xf]
    %v284 = vld [vmem:[#allocation8 + $0x8] sm:$0xf]
    %v285 = vld [vmem:[#allocation8 + $0xc] sm:$0xf]
    %v286 = vld [vmem:[#allocation8 + $0x10] sm:$0xf]
    %v287 = vld [vmem:[#allocation8 + $0x14] sm:$0xf]
    %v288 = vld [vmem:[#allocation8 + $0x18] sm:$0xf]
    %v289 = vld [vmem:[#allocation8 + $0x1c] sm:$0xf]
    %v290 = vld [vmem:[#allocation8 + $0x20] sm:$0xf]
    %v291 = vld [vmem:[#allocation8 + $0x24] sm:$0xf]
    %v292 = vld [vmem:[#allocation8 + $0x28] sm:$0xf]
    %v293 = vld [vmem:[#allocation8 + $0x2c] sm:$0xf]
    %v294 = vld [vmem:[#allocation8 + $0x30] sm:$0xf]
    %v295 = vld [vmem:[#allocation8 + $0x34] sm:$0xf]
    %v296 = vld [vmem:[#allocation8 + $0x38] sm:$0xf]
    %v297 = vld [vmem:[#allocation8 + $0x3c] sm:$0xf]
    %v298 = vld [vmem:[%s4] sm:$0x1]
    %v300 = vperm.slane %v298, 0
    %v318 = vunpack.c.l.b16 %v282
    %v319 = vunpack.c.l.b16 %v283
    %v320 = vunpack.c.l.b16 %v284
    %v321 = vunpack.c.l.b16 %v285
    %v322 = vunpack.c.l.b16 %v286
    %v323 = vunpack.c.l.b16 %v287
    %v324 = vunpack.c.l.b16 %v288
    %v325 = vunpack.c.l.b16 %v289
    %v326 = vunpack.c.l.b16 %v290
    %v327 = vunpack.c.l.b16 %v291
    %v328 = vunpack.c.l.b16 %v292
    %v329 = vunpack.c.l.b16 %v293
    %v330 = vunpack.c.l.b16 %v294
    %v331 = vunpack.c.l.b16 %v295
    %v332 = vunpack.c.l.b16 %v296
    %v333 = vunpack.c.l.b16 %v297
    %v334 = vpack.c.b16 %v319, %v318
    %v335 = vpack.c.b16 %v321, %v320
    %v336 = vpack.c.b16 %v323, %v322
    %v337 = vpack.c.b16 %v325, %v324
    %v338 = vpack.c.b16 %v327, %v326
    %v339 = vpack.c.b16 %v329, %v328
    %v340 = vpack.c.b16 %v331, %v330
    %v341 = vpack.c.b16 %v333, %v332
    %350 = vmatpush.bf16.msra.mxu0 %v341
    %351 = vmatpush.bf16.msra.mxu0 %v340
    %352 = vmatpush.bf16.msra.mxu0 %v339
    %353 = vmatpush.bf16.msra.mxu0 %v338
    %354 = vmatpush.bf16.msra.mxu0 %v337
    %355 = vmatpush.bf16.msra.mxu0 %v336
    %356 = vmatpush.bf16.msra.mxu0 %v335
    %357 = vmatpush.bf16.msra.mxu0 %v334
    %358 = vmatmul.bf16.gmra.mxu0 %v280
    %v359 = vpop.f32.mrf.mxu0
    %v360 = vadd.f32 %v300, %v359
    %v361 = vpop.f32.mrf.mxu0
    %v362 = vadd.f32 %v300, %v361
    %363 = vmatmul.bf16.gmra.mxu0 %v281
    %v364 = vpop.f32.mrf.mxu0
    %v365 = vadd.f32 %v300, %v364
    %v366 = vpop.f32.mrf.mxu0
    %v367 = vadd.f32 %v300, %v366
    %368 = vdwg.mxu0
    %369 = vst [vmem:[#allocation10] sm:$0xff] %v360
    %370 = vst [vmem:[#allocation10 + $0x8] sm:$0xff] %v362
    %371 = vst [vmem:[#allocation10 + $0x10] sm:$0xff] %v365
    %372 = vst [vmem:[#allocation10 + $0x18] sm:$0xff] %v367
    // Predicated region
    $region38: #{tpu_custom_call.1} parent=1 // pred_check
      _
    $region39: #{tpu_custom_call.1} parent=1 // pred_check_branch
      %374 = sbr.rel (0) target = $region41
    $region40: #{tpu_custom_call.1} parent=1 // pred_region
      %376 = vsyncadd [#allocation4], 0
      %s377 = sshll.u32 [#allocation10], 4
      %s378 = int_to_ptr.vmem [resolvable:$true] %s377
      %s379 = sshll.u32 %s5, 4
      %s380 = int_to_ptr.hbm [resolvable:$true] %s379
      %385 = dma.vmem_to_hbm [thread:$0]  %s378, 512, %s380, [#allocation4], 128, 128, 8
    $region41: #{tpu_custom_call.1} parent=1 // pred_fallthru
      _
    // Predicated region
    $region42: #{tpu_custom_call.1} parent=1 // pred_check
      _
    $region43: #{tpu_custom_call.1} parent=1 // pred_check_branch
      %387 = sbr.rel (0) target = $region45
    $region44: #{tpu_custom_call.1} parent=1 // pred_region
      %389 = dma.done [#allocation4], 512
    $region45: #{tpu_custom_call.1} parent=1 // pred_fallthru
      _
    %390 = vsyncpa [#allocation3], 1
    %391 = vsyncpa [#allocation6], 1
    %392 = vsyncpa [#allocation9], 1
    %393 = vsyncpa [#allocation4], 1

</llo_original>
